<compile_context>
chip_gen: v5e
topology: v5e:2x2
jax: 0.10.0
libtpu: 0.0.40
codegen_flags: <defaults>
</compile_context>

<pallas_src>
import jax
import jax.numpy as jnp
from jax.experimental import pallas as pl
from jax.experimental.pallas import tpu as pltpu

N_OUT_PAD = 128  # final layer padded from 10 -> 128 lanes (zeros)


def _round_up(n, m):
    return ((n + m - 1) // m) * m


def mlp_kernel(x_ref, w1_ref, b1_ref, w2_ref, b2_ref, w3_ref, b3_ref, o_ref):
    # Layer 1: (TB, 784)bf16 @ (784, 128)bf16 -> f32 acc, bias + ReLU in f32.
    h1 = jnp.dot(x_ref[...], w1_ref[...], preferred_element_type=jnp.float32)
    h1 = jnp.maximum(h1 + b1_ref[...], 0.0)
    # Layer 2: (TB, 128) @ (128, 64), bias + ReLU.
    h2 = jnp.dot(h1.astype(w2_ref.dtype), w2_ref[...],
                 preferred_element_type=jnp.float32)
    h2 = jnp.maximum(h2 + b2_ref[...], 0.0)
    # Layer 3: (TB, 64) @ (64, 128_padded) + bias; real logits live in [:, :10].
    out = jnp.dot(h2.astype(w3_ref.dtype), w3_ref[...],
                  preferred_element_type=jnp.float32)
    o_ref[...] = (out + b3_ref[...]).astype(o_ref.dtype)


def net_forward(x, params, *, block_b=1024, compute_dtype=jnp.bfloat16):
    """x: (B, 1, 28, 28) or (B, 784). Returns (B, 10) float32 logits."""
    w1, b1, w2, b2, w3, b3 = params
    x2d = x.reshape(-1, 28 * 28)            # same as torch x.view(-1, 784)
    B = x2d.shape[0]

    # Batch tile: as large as block_b allows, sublane-aligned (multiple of 8).
    TB = min(block_b, _round_up(max(B, 1), 8))
    B_pad = _round_up(B, TB)
    if B_pad != B:
        # Zero-pad the ragged tail block; padded rows are sliced away below.
        x2d = jnp.pad(x2d, ((0, B_pad - B), (0, 0)))

    # Lane-dense final layer: pad 10 -> 128 output features with zeros.
    w3p = jnp.pad(w3, ((0, 0), (0, N_OUT_PAD - w3.shape[1])))
    b3p = jnp.pad(b3, ((0, 0), (0, N_OUT_PAD - b3.shape[1])))

    # bf16 operands for the MXU / halved HBM traffic; biases stay f32.
    xc = x2d.astype(compute_dtype)
    w1c = w1.astype(compute_dtype)
    w2c = w2.astype(compute_dtype)
    w3c = w3p.astype(compute_dtype)
    b1f = b1.astype(jnp.float32)
    b2f = b2.astype(jnp.float32)
    b3f = b3p.astype(jnp.float32)

    grid = (B_pad // TB,)
    const = lambda i: (0, 0)  # weights/biases resident in VMEM across steps

    flops = 2 * B_pad * (784 * 128 + 128 * 64 + 64 * N_OUT_PAD)
    bytes_accessed = (
        xc.size * xc.dtype.itemsize                    # streamed input
        + B_pad * N_OUT_PAD * 4                        # streamed output (f32)
        + sum(a.size * a.dtype.itemsize
              for a in (w1c, w2c, w3c, b1f, b2f, b3f))  # resident params
    )

    out = pl.pallas_call(
        mlp_kernel,
        out_shape=jax.ShapeDtypeStruct((B_pad, N_OUT_PAD), jnp.float32),
        grid=grid,
        in_specs=[
            pl.BlockSpec((TB, 784), lambda i: (i, 0)),       # x: tiled over B
            pl.BlockSpec((784, 128), const),                 # w1
            pl.BlockSpec((1, 128), const),                   # b1
            pl.BlockSpec((128, 64), const),                  # w2
            pl.BlockSpec((1, 64), const),                    # b2
            pl.BlockSpec((64, N_OUT_PAD), const),            # w3 (padded)
            pl.BlockSpec((1, N_OUT_PAD), const),             # b3 (padded)
        ],
        out_specs=pl.BlockSpec((TB, N_OUT_PAD), lambda i: (i, 0)),
        compiler_params=pltpu.CompilerParams(
            dimension_semantics=("parallel",),               # v7x: 2 TCs share B
            vmem_limit_bytes=32 * 1024 * 1024,
        ),
        cost_estimate=pl.CostEstimate(
            flops=flops, transcendentals=0, bytes_accessed=bytes_accessed),
    )(xc, w1c, b1f, w2c, b2f, w3c, b3f)

    # Drop padded rows and the 118 zero output lanes.
    return out[:B, :10]


def init_params(key):
    """Init matching torch.nn.Linear default (uniform +/- 1/sqrt(fan_in))."""
    def linear(k, fan_in, fan_out):
        kw, kb = jax.random.split(k)
        bound = 1.0 / jnp.sqrt(fan_in)
        w = jax.random.uniform(kw, (fan_in, fan_out), jnp.float32, -bound, bound)
        b = jax.random.uniform(kb, (1, fan_out), jnp.float32, -bound, bound)
        return w, b

    k1, k2, k3 = jax.random.split(key, 3)
    w1, b1 = linear(k1, 28 * 28, 128)
    w2, b2 = linear(k2, 128, 64)
    w3, b3 = linear(k3, 64, 10)
    return (w1, b1, w2, b2, w3, b3)


if __name__ == "__main__":
    key = jax.random.PRNGKey(0)
    kx, kp = jax.random.split(key)

    # Small batch of MNIST-shaped inputs (NCHW), consistent with x.view(-1, 784).
    x = jax.random.normal(kx, (2, 1, 28, 28), jnp.float32)
    params = init_params(kp)

    out = net_forward(x, params)
    out = jax.block_until_ready(out)
    assert out.shape == (2, 10)

    # Reference with the *same* bf16 operand rounding (f32 accumulation), so the
    # only difference vs. the kernel is MXU accumulation order.
    w1, b1, w2, b2, w3, b3 = params
    xr = x.reshape(-1, 784).astype(jnp.bfloat16)
    w1c, w2c, w3c = (w.astype(jnp.bfloat16) for w in (w1, w2, w3))
    ref = jnp.maximum(
        jnp.dot(xr, w1c, preferred_element_type=jnp.float32) + b1, 0.0)
    ref = jnp.maximum(
        jnp.dot(ref.astype(jnp.bfloat16), w2c,
                preferred_element_type=jnp.float32) + b2, 0.0)
    ref = jnp.dot(ref.astype(jnp.bfloat16), w3c,
                  preferred_element_type=jnp.float32) + b3
    assert jnp.allclose(out, ref, atol=2e-3, rtol=2e-3)

    print("KERNEL_OK")
</pallas_src>

<mosaic_0001>
module attributes {stable_mosaic.version = 11 : i64} {
  func.func @mlp_kernel(%arg0: i32, %arg1: memref<8x784xbf16, #tpu.memory_space<vmem>>, %arg2: memref<784x128xbf16, #tpu.memory_space<vmem>>, %arg3: memref<1x128xf32, #tpu.memory_space<vmem>>, %arg4: memref<128x64xbf16, #tpu.memory_space<vmem>>, %arg5: memref<1x64xf32, #tpu.memory_space<vmem>>, %arg6: memref<64x128xbf16, #tpu.memory_space<vmem>>, %arg7: memref<1x128xf32, #tpu.memory_space<vmem>>, %arg8: memref<8x128xf32, #tpu.memory_space<vmem>>) attributes {dimension_semantics = [#tpu.dimension_semantics<parallel>], iteration_bounds = array<i64: 1>, scalar_prefetch = 0 : i64, scratch_operands = 0 : i64, tpu.core_type = #tpu.core_type<tc>, window_params = [{transform_indices = @transform_0, window_bounds = array<i64: 8, 784>}, {pipeline_mode = #tpu.pipeline_mode<synchronous>, transform_indices = @transform_1, window_bounds = array<i64: 784, 128>}, {pipeline_mode = #tpu.pipeline_mode<synchronous>, transform_indices = @transform_2, window_bounds = array<i64: 1, 128>}, {pipeline_mode = #tpu.pipeline_mode<synchronous>, transform_indices = @transform_3, window_bounds = array<i64: 128, 64>}, {pipeline_mode = #tpu.pipeline_mode<synchronous>, transform_indices = @transform_4, window_bounds = array<i64: 1, 64>}, {pipeline_mode = #tpu.pipeline_mode<synchronous>, transform_indices = @transform_5, window_bounds = array<i64: 64, 128>}, {pipeline_mode = #tpu.pipeline_mode<synchronous>, transform_indices = @transform_6, window_bounds = array<i64: 1, 128>}, {transform_indices = @transform_7, window_bounds = array<i64: 8, 128>}]} {
    %c0 = arith.constant 0 : index
    %c0_0 = arith.constant 0 : index
    %0 = vector.load %arg1[%c0, %c0_0] : memref<8x784xbf16, #tpu.memory_space<vmem>>, vector<8x784xbf16>
    %c0_1 = arith.constant 0 : index
    %c0_2 = arith.constant 0 : index
    %1 = vector.load %arg2[%c0_1, %c0_2] : memref<784x128xbf16, #tpu.memory_space<vmem>>, vector<784x128xbf16>
    %cst = arith.constant dense<0.000000e+00> : vector<8x128xf32>
    %2 = tpu.matmul %0, %1, %cst {dimension_numbers = #tpu.dot_dimension_numbers<[1], [0], [0], [1], [0, 0, 1, 1], [], []>} : vector<8x784xbf16>, vector<784x128xbf16>, vector<8x128xf32> -> vector<8x128xf32>
    %c0_3 = arith.constant 0 : index
    %c0_4 = arith.constant 0 : index
    %3 = vector.load %arg3[%c0_3, %c0_4] : memref<1x128xf32, #tpu.memory_space<vmem>>, vector<1x128xf32>
    %4 = vector.broadcast %3 : vector<1x128xf32> to vector<8x128xf32>
    %5 = arith.addf %2, %4 : vector<8x128xf32>
    %cst_5 = arith.constant 0.000000e+00 : f32
    %6 = vector.broadcast %cst_5 : f32 to vector<8x128xf32>
    %7 = arith.maximumf %5, %6 : vector<8x128xf32>
    %8 = arith.truncf %7 : vector<8x128xf32> to vector<8x128xbf16>
    %c0_6 = arith.constant 0 : index
    %c0_7 = arith.constant 0 : index
    %9 = vector.load %arg4[%c0_6, %c0_7] : memref<128x64xbf16, #tpu.memory_space<vmem>>, vector<128x64xbf16>
    %cst_8 = arith.constant dense<0.000000e+00> : vector<8x64xf32>
    %10 = tpu.matmul %8, %9, %cst_8 {dimension_numbers = #tpu.dot_dimension_numbers<[1], [0], [0], [1], [0, 0, 1, 1], [], []>} : vector<8x128xbf16>, vector<128x64xbf16>, vector<8x64xf32> -> vector<8x64xf32>
    %c0_9 = arith.constant 0 : index
    %c0_10 = arith.constant 0 : index
    %11 = vector.load %arg5[%c0_9, %c0_10] : memref<1x64xf32, #tpu.memory_space<vmem>>, vector<1x64xf32>
    %12 = vector.broadcast %11 : vector<1x64xf32> to vector<8x64xf32>
    %13 = arith.addf %10, %12 : vector<8x64xf32>
    %cst_11 = arith.constant 0.000000e+00 : f32
    %14 = vector.broadcast %cst_11 : f32 to vector<8x64xf32>
    %15 = arith.maximumf %13, %14 : vector<8x64xf32>
    %16 = arith.truncf %15 : vector<8x64xf32> to vector<8x64xbf16>
    %c0_12 = arith.constant 0 : index
    %c0_13 = arith.constant 0 : index
    %17 = vector.load %arg6[%c0_12, %c0_13] : memref<64x128xbf16, #tpu.memory_space<vmem>>, vector<64x128xbf16>
    %cst_14 = arith.constant dense<0.000000e+00> : vector<8x128xf32>
    %18 = tpu.matmul %16, %17, %cst_14 {dimension_numbers = #tpu.dot_dimension_numbers<[1], [0], [0], [1], [0, 0, 1, 1], [], []>} : vector<8x64xbf16>, vector<64x128xbf16>, vector<8x128xf32> -> vector<8x128xf32>
    %c0_15 = arith.constant 0 : index
    %c0_16 = arith.constant 0 : index
    %19 = vector.load %arg7[%c0_15, %c0_16] : memref<1x128xf32, #tpu.memory_space<vmem>>, vector<1x128xf32>
    %20 = vector.broadcast %19 : vector<1x128xf32> to vector<8x128xf32>
    %21 = arith.addf %18, %20 : vector<8x128xf32>
    %c0_17 = arith.constant 0 : index
    %c0_18 = arith.constant 0 : index
    %22 = vector.load %arg8[%c0_17, %c0_18] : memref<8x128xf32, #tpu.memory_space<vmem>>, vector<8x128xf32>
    tpu.vector_store %arg8[%c0_17, %c0_18], %21 {strides = array<i32>} : memref<8x128xf32, #tpu.memory_space<vmem>>, vector<8x128xf32>,
    return
  }
  func.func @transform_0(%arg0: i32) -> (i32, i32) {
    %c0_i32 = arith.constant 0 : i32
    %c0_i32_0 = arith.constant 0 : i32
    return %arg0, %c0_i32 : i32, i32
  }
  func.func @transform_1(%arg0: i32) -> (i32, i32) {
    %c0_i32 = arith.constant 0 : i32
    %c0_i32_0 = arith.constant 0 : i32
    %c0_i32_1 = arith.constant 0 : i32
    return %c0_i32, %c0_i32_0 : i32, i32
  }
  func.func @transform_2(%arg0: i32) -> (i32, i32) {
    %c0_i32 = arith.constant 0 : i32
    %c0_i32_0 = arith.constant 0 : i32
    %c0_i32_1 = arith.constant 0 : i32
    return %c0_i32, %c0_i32_0 : i32, i32
  }
  func.func @transform_3(%arg0: i32) -> (i32, i32) {
    %c0_i32 = arith.constant 0 : i32
    %c0_i32_0 = arith.constant 0 : i32
    %c0_i32_1 = arith.constant 0 : i32
    return %c0_i32, %c0_i32_0 : i32, i32
  }
  func.func @transform_4(%arg0: i32) -> (i32, i32) {
    %c0_i32 = arith.constant 0 : i32
    %c0_i32_0 = arith.constant 0 : i32
    %c0_i32_1 = arith.constant 0 : i32
    return %c0_i32, %c0_i32_0 : i32, i32
  }
  func.func @transform_5(%arg0: i32) -> (i32, i32) {
    %c0_i32 = arith.constant 0 : i32
    %c0_i32_0 = arith.constant 0 : i32
    %c0_i32_1 = arith.constant 0 : i32
    return %c0_i32, %c0_i32_0 : i32, i32
  }
  func.func @transform_6(%arg0: i32) -> (i32, i32) {
    %c0_i32 = arith.constant 0 : i32
    %c0_i32_0 = arith.constant 0 : i32
    %c0_i32_1 = arith.constant 0 : i32
    return %c0_i32, %c0_i32_0 : i32, i32
  }
  func.func @transform_7(%arg0: i32) -> (i32, i32) {
    %c0_i32 = arith.constant 0 : i32
    %c0_i32_0 = arith.constant 0 : i32
    return %arg0, %c0_i32 : i32, i32
  }
}

</mosaic_0001>

<llo_original>
// kernel: tpu_custom_call.1
$region0: #{tpu_custom_call.1}
  #allocation0 [shape = 'u32[]', space=smem, size = 0x4, offset = 0x4, fixed_abs, tag = 'smem constant byte address 0x4 - core index']
  #allocation1 [shape = 'u32[72,128]{1,0:T(1,128)}', space=vmem, size = 0x9000, scoped, tag = 'internal scratch']
  %s0 = inlined_call_operand.vmem [shape: bf16[8,784], index: 0, kind: input, shape index: {}]
  %s1 = inlined_call_operand.hbm [shape: bf16[784,128], index: 1, kind: input, shape index: {}]
  %s2 = inlined_call_operand.vmem [shape: f32[1,128], index: 2, kind: input, shape index: {}]
  %s3 = inlined_call_operand.vmem [shape: bf16[128,64], index: 3, kind: input, shape index: {}]
  %s4 = inlined_call_operand.vmem [shape: f32[1,64], index: 4, kind: input, shape index: {}]
  %s5 = inlined_call_operand.vmem [shape: bf16[64,128], index: 5, kind: input, shape index: {}]
  %s6 = inlined_call_operand.vmem [shape: f32[1,128], index: 6, kind: input, shape index: {}]
  %s7 = inlined_call_operand.hbm [shape: f32[8,128], index: 7, kind: output, shape index: {}]
  %s8 = sld [smem:[#allocation0]]
  $region42: #{tpu_custom_call.1} parent=0
    _
  %s10 = ssub.s32 1, %s8
  %s11 = scalar_select 0, %s10, %s8
  $region1: #{tpu_custom_call.1} parent=0
    #allocation2 [shape = 'u8[200704]{0}', space=vmem, size = 0x31000, scoped, tag = 'input window, operand 1, single buffered']
    #allocation3 [shape = 's32[1]{0}', space=sflag, size = 0x4, scoped, tag = 'scoped memory for tpu_custom_call.1']
    #allocation4 [shape = 's32[1]{0}', space=sflag, size = 0x4, scoped, tag = 'scoped memory for tpu_custom_call.1']
    #allocation5 [shape = 'u8[4096]{0}', space=vmem, size = 0x1000, scoped, tag = 'output window, operand 0, single buffered']
    %12 = vsyncpa [#allocation3], 0
    %13 = vsyncpa [#allocation4], 0
    // Predicated region
    $region2: #{tpu_custom_call.1} parent=1 // pred_check
      _
    $region3: #{tpu_custom_call.1} parent=1 // pred_check_branch
      %15 = sbr.rel (0) target = $region5
    $region4: #{tpu_custom_call.1} parent=1 // pred_region
      _
    $region5: #{tpu_custom_call.1} parent=1 // pred_fallthru
      _
    // Predicated region
    $region6: #{tpu_custom_call.1} parent=1 // pred_check
      _
    $region7: #{tpu_custom_call.1} parent=1 // pred_check_branch
      %17 = sbr.rel (0) target = $region9
    $region8: #{tpu_custom_call.1} parent=1 // pred_region
      %19 = vsyncadd [#allocation3], 0
      %s20 = sshll.u32 %s1, 4
      %s21 = int_to_ptr.hbm [resolvable:$true] %s20
      %s22 = sshll.u32 [#allocation2], 4
      %s23 = int_to_ptr.vmem [resolvable:$true] %s22
      %28 = dma.hbm_to_vmem [thread:$0]  %s21, 6272, %s23, [#allocation3], 64, 64, 4
    $region9: #{tpu_custom_call.1} parent=1 // pred_fallthru
      _
    // Predicated region
    $region10: #{tpu_custom_call.1} parent=1 // pred_check
      _
    $region11: #{tpu_custom_call.1} parent=1 // pred_check_branch
      %30 = sbr.rel (0) target = $region13
    $region12: #{tpu_custom_call.1} parent=1 // pred_region
      _
    $region13: #{tpu_custom_call.1} parent=1 // pred_fallthru
      _
    // Predicated region
    $region14: #{tpu_custom_call.1} parent=1 // pred_check
      _
    $region15: #{tpu_custom_call.1} parent=1 // pred_check_branch
      %32 = sbr.rel (0) target = $region17
    $region16: #{tpu_custom_call.1} parent=1 // pred_region
      _
    $region17: #{tpu_custom_call.1} parent=1 // pred_fallthru
      _
    // Predicated region
    $region18: #{tpu_custom_call.1} parent=1 // pred_check
      _
    $region19: #{tpu_custom_call.1} parent=1 // pred_check_branch
      %34 = sbr.rel (0) target = $region21
    $region20: #{tpu_custom_call.1} parent=1 // pred_region
      _
    $region21: #{tpu_custom_call.1} parent=1 // pred_fallthru
      _
    // Predicated region
    $region22: #{tpu_custom_call.1} parent=1 // pred_check
      _
    $region23: #{tpu_custom_call.1} parent=1 // pred_check_branch
      %36 = sbr.rel (0) target = $region25
    $region24: #{tpu_custom_call.1} parent=1 // pred_region
      _
    $region25: #{tpu_custom_call.1} parent=1 // pred_fallthru
      _
    // Predicated region
    $region26: #{tpu_custom_call.1} parent=1 // pred_check
      _
    $region27: #{tpu_custom_call.1} parent=1 // pred_check_branch
      %38 = sbr.rel (0) target = $region29
    $region28: #{tpu_custom_call.1} parent=1 // pred_region
      _
    $region29: #{tpu_custom_call.1} parent=1 // pred_fallthru
      _
    // Predicated region
    $region30: #{tpu_custom_call.1} parent=1 // pred_check
      _
    $region31: #{tpu_custom_call.1} parent=1 // pred_check_branch
      %40 = sbr.rel (0) target = $region33
    $region32: #{tpu_custom_call.1} parent=1 // pred_region
      %42 = dma.done [#allocation3], 6272
    $region33: #{tpu_custom_call.1} parent=1 // pred_fallthru
      _
    %v44 = vld [vmem:[%s0] sm:$0xff]
    %v45 = vld [vmem:[%s0 + $0x8] sm:$0xff]
    %v46 = vld [vmem:[%s0 + $0x10] sm:$0xff]
    %v47 = vld [vmem:[%s0 + $0x18] sm:$0xf]
    %v48 = vld [vmem:[#allocation2] sm:$0xf]
    %v49 = vld [vmem:[#allocation2 + $0x4] sm:$0xf]
    %v50 = vld [vmem:[#allocation2 + $0x8] sm:$0xf]
    %v51 = vld [vmem:[#allocation2 + $0xc] sm:$0xf]
    %v52 = vld [vmem:[#allocation2 + $0x10] sm:$0xf]
    %v53 = vld [vmem:[#allocation2 + $0x14] sm:$0xf]
    %v54 = vld [vmem:[#allocation2 + $0x18] sm:$0xf]
    %v55 = vld [vmem:[#allocation2 + $0x1c] sm:$0xf]
    %v56 = vld [vmem:[#allocation2 + $0x20] sm:$0xf]
    %v57 = vld [vmem:[#allocation2 + $0x24] sm:$0xf]
    %v58 = vld [vmem:[#allocation2 + $0x28] sm:$0xf]
    %v59 = vld [vmem:[#allocation2 + $0x2c] sm:$0xf]
    %v60 = vld [vmem:[#allocation2 + $0x30] sm:$0xf]
    %v61 = vld [vmem:[#allocation2 + $0x34] sm:$0xf]
    %v62 = vld [vmem:[#allocation2 + $0x38] sm:$0xf]
    %v63 = vld [vmem:[#allocation2 + $0x3c] sm:$0xf]
    %v64 = vld [vmem:[#allocation2 + $0x40] sm:$0xf]
    %v65 = vld [vmem:[#allocation2 + $0x44] sm:$0xf]
    %v66 = vld [vmem:[#allocation2 + $0x48] sm:$0xf]
    %v67 = vld [vmem:[#allocation2 + $0x4c] sm:$0xf]
    %v68 = vld [vmem:[#allocation2 + $0x50] sm:$0xf]
    %v69 = vld [vmem:[#allocation2 + $0x54] sm:$0xf]
    %v70 = vld [vmem:[#allocation2 + $0x58] sm:$0xf]
    %v71 = vld [vmem:[#allocation2 + $0x5c] sm:$0xf]
    %v72 = vld [vmem:[#allocation2 + $0x60] sm:$0xf]
    %v73 = vld [vmem:[#allocation2 + $0x64] sm:$0xf]
    %v74 = vld [vmem:[#allocation2 + $0x68] sm:$0xf]
    %v75 = vld [vmem:[#allocation2 + $0x6c] sm:$0xf]
    %v76 = vld [vmem:[#allocation2 + $0x70] sm:$0xf]
    %v77 = vld [vmem:[#allocation2 + $0x74] sm:$0xf]
    %v78 = vld [vmem:[#allocation2 + $0x78] sm:$0xf]
    %v79 = vld [vmem:[#allocation2 + $0x7c] sm:$0xf]
    %v80 = vld [vmem:[#allocation2 + $0x80] sm:$0xf]
    %v81 = vld [vmem:[#allocation2 + $0x84] sm:$0xf]
    %v82 = vld [vmem:[#allocation2 + $0x88] sm:$0xf]
    %v83 = vld [vmem:[#allocation2 + $0x8c] sm:$0xf]
    %v84 = vld [vmem:[#allocation2 + $0x90] sm:$0xf]
    %v85 = vld [vmem:[#allocation2 + $0x94] sm:$0xf]
    %v86 = vld [vmem:[#allocation2 + $0x98] sm:$0xf]
    %v87 = vld [vmem:[#allocation2 + $0x9c] sm:$0xf]
    %v88 = vld [vmem:[#allocation2 + $0xa0] sm:$0xf]
    %v89 = vld [vmem:[#allocation2 + $0xa4] sm:$0xf]
    %v90 = vld [vmem:[#allocation2 + $0xa8] sm:$0xf]
    %v91 = vld [vmem:[#allocation2 + $0xac] sm:$0xf]
    %v92 = vld [vmem:[#allocation2 + $0xb0] sm:$0xf]
    %v93 = vld [vmem:[#allocation2 + $0xb4] sm:$0xf]
    %v94 = vld [vmem:[#allocation2 + $0xb8] sm:$0xf]
    %v95 = vld [vmem:[#allocation2 + $0xbc] sm:$0xf]
    %v96 = vld [vmem:[#allocation2 + $0xc0] sm:$0xf]
    %v97 = vld [vmem:[#allocation2 + $0xc4] sm:$0xf]
    %v98 = vld [vmem:[#allocation2 + $0xc8] sm:$0xf]
    %v99 = vld [vmem:[#allocation2 + $0xcc] sm:$0xf]
    %v100 = vld [vmem:[#allocation2 + $0xd0] sm:$0xf]
    %v101 = vld [vmem:[#allocation2 + $0xd4] sm:$0xf]
    %v102 = vld [vmem:[#allocation2 + $0xd8] sm:$0xf]
    %v103 = vld [vmem:[#allocation2 + $0xdc] sm:$0xf]
    %v104 = vld [vmem:[#allocation2 + $0xe0] sm:$0xf]
    %v105 = vld [vmem:[#allocation2 + $0xe4] sm:$0xf]
    %v106 = vld [vmem:[#allocation2 + $0xe8] sm:$0xf]
    %v107 = vld [vmem:[#allocation2 + $0xec] sm:$0xf]
    %v108 = vld [vmem:[#allocation2 + $0xf0] sm:$0xf]
    %v109 = vld [vmem:[#allocation2 + $0xf4] sm:$0xf]
    %v110 = vld [vmem:[#allocation2 + $0xf8] sm:$0xf]
    %v111 = vld [vmem:[#allocation2 + $0xfc] sm:$0xf]
    %v112 = vld [vmem:[#allocation2 + $0x100] sm:$0xf]
    %v113 = vld [vmem:[#allocation2 + $0x104] sm:$0xf]
    %v114 = vld [vmem:[#allocation2 + $0x108] sm:$0xf]
    %v115 = vld [vmem:[#allocation2 + $0x10c] sm:$0xf]
    %v116 = vld [vmem:[#allocation2 + $0x110] sm:$0xf]
    %v117 = vld [vmem:[#allocation2 + $0x114] sm:$0xf]
    %v118 = vld [vmem:[#allocation2 + $0x118] sm:$0xf]
    %v119 = vld [vmem:[#allocation2 + $0x11c] sm:$0xf]
    %v120 = vld [vmem:[#allocation2 + $0x120] sm:$0xf]
    %v121 = vld [vmem:[#allocation2 + $0x124] sm:$0xf]
    %v122 = vld [vmem:[#allocation2 + $0x128] sm:$0xf]
    %v123 = vld [vmem:[#allocation2 + $0x12c] sm:$0xf]
    %v124 = vld [vmem:[#allocation2 + $0x130] sm:$0xf]
    %v125 = vld [vmem:[#allocation2 + $0x134] sm:$0xf]
    %v126 = vld [vmem:[#allocation2 + $0x138] sm:$0xf]
    %v127 = vld [vmem:[#allocation2 + $0x13c] sm:$0xf]
    %v128 = vld [vmem:[#allocation2 + $0x140] sm:$0xf]
    %v129 = vld [vmem:[#allocation2 + $0x144] sm:$0xf]
    %v130 = vld [vmem:[#allocation2 + $0x148] sm:$0xf]
    %v131 = vld [vmem:[#allocation2 + $0x14c] sm:$0xf]
    %v132 = vld [vmem:[#allocation2 + $0x150] sm:$0xf]
    %v133 = vld [vmem:[#allocation2 + $0x154] sm:$0xf]
    %v134 = vld [vmem:[#allocation2 + $0x158] sm:$0xf]
    %v135 = vld [vmem:[#allocation2 + $0x15c] sm:$0xf]
    %v136 = vld [vmem:[#allocation2 + $0x160] sm:$0xf]
    %v137 = vld [vmem:[#allocation2 + $0x164] sm:$0xf]
    %v138 = vld [vmem:[#allocation2 + $0x168] sm:$0xf]
    %v139 = vld [vmem:[#allocation2 + $0x16c] sm:$0xf]
    %v140 = vld [vmem:[#allocation2 + $0x170] sm:$0xf]
    %v141 = vld [vmem:[#allocation2 + $0x174] sm:$0xf]
    %v142 = vld [vmem:[#allocation2 + $0x178] sm:$0xf]
    %v143 = vld [vmem:[#allocation2 + $0x17c] sm:$0xf]
    %v144 = vld [vmem:[#allocation2 + $0x180] sm:$0xf]
    %v145 = vld [vmem:[#allocation2 + $0x184] sm:$0xf]
    %v146 = vld [vmem:[%s2] sm:$0x1]
    %v148 = vperm.slane %v146, 0
    %v154 = vunpack.c.l.b16 %v44
    %v155 = vunpack.c.h.b16 %v44
    %v156 = vunpack.c.l.b16 %v45
    %v157 = vunpack.c.h.b16 %v45
    %v158 = vunpack.c.l.b16 %v46
    %v159 = vunpack.c.h.b16 %v46
    %v160 = vunpack.c.l.b16 %v47
    %v161 = vpack.c.b16 %v154, %v154
    %v162 = vpack.c.b16 %v155, %v155
    %v163 = vpack.c.b16 %v156, %v156
    %v164 = vpack.c.b16 %v157, %v157
    %v165 = vpack.c.b16 %v158, %v158
    %v166 = vpack.c.b16 %v159, %v159
    %v167 = vpack.c.b16 %v160, %v160
    %v272 = vunpack.c.l.b16 %v48
    %v273 = vunpack.c.l.b16 %v49
    %v274 = vunpack.c.l.b16 %v50
    %v275 = vunpack.c.l.b16 %v51
    %v276 = vunpack.c.l.b16 %v52
    %v277 = vunpack.c.l.b16 %v53
    %v278 = vunpack.c.l.b16 %v54
    %v279 = vunpack.c.l.b16 %v55
    %v280 = vunpack.c.l.b16 %v56
    %v281 = vunpack.c.l.b16 %v57
    %v282 = vunpack.c.l.b16 %v58
    %v283 = vunpack.c.l.b16 %v59
    %v284 = vunpack.c.l.b16 %v60
    %v285 = vunpack.c.l.b16 %v61
    %v286 = vunpack.c.l.b16 %v62
    %v287 = vunpack.c.l.b16 %v63
    %v288 = vunpack.c.l.b16 %v64
    %v289 = vunpack.c.l.b16 %v65
    %v290 = vunpack.c.l.b16 %v66
    %v291 = vunpack.c.l.b16 %v67
    %v292 = vunpack.c.l.b16 %v68
    %v293 = vunpack.c.l.b16 %v69
    %v294 = vunpack.c.l.b16 %v70
    %v295 = vunpack.c.l.b16 %v71
    %v296 = vunpack.c.l.b16 %v72
    %v297 = vunpack.c.l.b16 %v73
    %v298 = vunpack.c.l.b16 %v74
    %v299 = vunpack.c.l.b16 %v75
    %v300 = vunpack.c.l.b16 %v76
    %v301 = vunpack.c.l.b16 %v77
    %v302 = vunpack.c.l.b16 %v78
    %v303 = vunpack.c.l.b16 %v79
    %v304 = vunpack.c.l.b16 %v80
    %v305 = vunpack.c.l.b16 %v81
    %v306 = vunpack.c.l.b16 %v82
    %v307 = vunpack.c.l.b16 %v83
    %v308 = vunpack.c.l.b16 %v84
    %v309 = vunpack.c.l.b16 %v85
    %v310 = vunpack.c.l.b16 %v86
    %v311 = vunpack.c.l.b16 %v87
    %v312 = vunpack.c.l.b16 %v88
    %v313 = vunpack.c.l.b16 %v89
    %v314 = vunpack.c.l.b16 %v90
    %v315 = vunpack.c.l.b16 %v91
    %v316 = vunpack.c.l.b16 %v92
    %v317 = vunpack.c.l.b16 %v93
    %v318 = vunpack.c.l.b16 %v94
    %v319 = vunpack.c.l.b16 %v95
    %v320 = vunpack.c.l.b16 %v96
    %v321 = vunpack.c.l.b16 %v97
    %v322 = vunpack.c.l.b16 %v98
    %v323 = vunpack.c.l.b16 %v99
    %v324 = vunpack.c.l.b16 %v100
    %v325 = vunpack.c.l.b16 %v101
    %v326 = vunpack.c.l.b16 %v102
    %v327 = vunpack.c.l.b16 %v103
    %v328 = vunpack.c.l.b16 %v104
    %v329 = vunpack.c.l.b16 %v105
    %v330 = vunpack.c.l.b16 %v106
    %v331 = vunpack.c.l.b16 %v107
    %v332 = vunpack.c.l.b16 %v108
    %v333 = vunpack.c.l.b16 %v109
    %v334 = vunpack.c.l.b16 %v110
    %v335 = vunpack.c.l.b16 %v111
    %v336 = vunpack.c.l.b16 %v112
    %v337 = vunpack.c.l.b16 %v113
    %v338 = vunpack.c.l.b16 %v114
    %v339 = vunpack.c.l.b16 %v115
    %v340 = vunpack.c.l.b16 %v116
    %v341 = vunpack.c.l.b16 %v117
    %v342 = vunpack.c.l.b16 %v118
    %v343 = vunpack.c.l.b16 %v119
    %v344 = vunpack.c.l.b16 %v120
    %v345 = vunpack.c.l.b16 %v121
    %v346 = vunpack.c.l.b16 %v122
    %v347 = vunpack.c.l.b16 %v123
    %v348 = vunpack.c.l.b16 %v124
    %v349 = vunpack.c.l.b16 %v125
    %v350 = vunpack.c.l.b16 %v126
    %v351 = vunpack.c.l.b16 %v127
    %v352 = vunpack.c.l.b16 %v128
    %v353 = vunpack.c.l.b16 %v129
    %v354 = vunpack.c.l.b16 %v130
    %v355 = vunpack.c.l.b16 %v131
    %v356 = vunpack.c.l.b16 %v132
    %v357 = vunpack.c.l.b16 %v133
    %v358 = vunpack.c.l.b16 %v134
    %v359 = vunpack.c.l.b16 %v135
    %v360 = vunpack.c.l.b16 %v136
    %v361 = vunpack.c.l.b16 %v137
    %v362 = vunpack.c.l.b16 %v138
    %v363 = vunpack.c.l.b16 %v139
    %v364 = vunpack.c.l.b16 %v140
    %v365 = vunpack.c.l.b16 %v141
    %v366 = vunpack.c.l.b16 %v142
    %v367 = vunpack.c.l.b16 %v143
    %v368 = vunpack.c.l.b16 %v144
    %v369 = vunpack.c.l.b16 %v145
    %v370 = vpack.c.b16 %v273, %v272
    %v371 = vpack.c.b16 %v275, %v274
    %v372 = vpack.c.b16 %v277, %v276
    %v373 = vpack.c.b16 %v279, %v278
    %v374 = vpack.c.b16 %v281, %v280
    %v375 = vpack.c.b16 %v283, %v282
    %v376 = vpack.c.b16 %v285, %v284
    %v377 = vpack.c.b16 %v287, %v286
    %v378 = vpack.c.b16 %v289, %v288
    %v379 = vpack.c.b16 %v291, %v290
    %v380 = vpack.c.b16 %v293, %v292
    %v381 = vpack.c.b16 %v295, %v294
    %v382 = vpack.c.b16 %v297, %v296
    %v383 = vpack.c.b16 %v299, %v298
    %v384 = vpack.c.b16 %v301, %v300
    %v385 = vpack.c.b16 %v303, %v302
    %v386 = vpack.c.b16 %v305, %v304
    %v387 = vpack.c.b16 %v307, %v306
    %v388 = vpack.c.b16 %v309, %v308
    %v389 = vpack.c.b16 %v311, %v310
    %v390 = vpack.c.b16 %v313, %v312
    %v391 = vpack.c.b16 %v315, %v314
    %v392 = vpack.c.b16 %v317, %v316
    %v393 = vpack.c.b16 %v319, %v318
    %v394 = vpack.c.b16 %v321, %v320
    %v395 = vpack.c.b16 %v323, %v322
    %v396 = vpack.c.b16 %v325, %v324
    %v397 = vpack.c.b16 %v327, %v326
    %v398 = vpack.c.b16 %v329, %v328
    %v399 = vpack.c.b16 %v331, %v330
    %v400 = vpack.c.b16 %v333, %v332
    %v401 = vpack.c.b16 %v335, %v334
    %v402 = vpack.c.b16 %v337, %v336
    %v403 = vpack.c.b16 %v339, %v338
    %v404 = vpack.c.b16 %v341, %v340
    %v405 = vpack.c.b16 %v343, %v342
    %v406 = vpack.c.b16 %v345, %v344
    %v407 = vpack.c.b16 %v347, %v346
    %v408 = vpack.c.b16 %v349, %v348
    %v409 = vpack.c.b16 %v351, %v350
    %v410 = vpack.c.b16 %v353, %v352
    %v411 = vpack.c.b16 %v355, %v354
    %v412 = vpack.c.b16 %v357, %v356
    %v413 = vpack.c.b16 %v359, %v358
    %v414 = vpack.c.b16 %v361, %v360
    %v415 = vpack.c.b16 %v363, %v362
    %v416 = vpack.c.b16 %v365, %v364
    %v417 = vpack.c.b16 %v367, %v366
    %v418 = vpack.c.b16 %v369, %v368
    %vm468 = vcmask 130048
    %v470 = vsel %vm468, %v167, 0
    %472 = vmatpush.bf16.msra.mxu0 %v377
    %473 = vmatpush.bf16.msra.mxu0 %v376
    %474 = vmatpush.bf16.msra.mxu0 %v375
    %475 = vmatpush.bf16.msra.mxu0 %v374
    %476 = vmatpush.bf16.msra.mxu0 %v373
    %477 = vmatpush.bf16.msra.mxu0 %v372
    %478 = vmatpush.bf16.msra.mxu0 %v371
    %479 = vmatpush.bf16.msra.mxu0 %v370
    %480 = vmatmul.bf16.gmra.mxu0 %v161
    %v481 = vpop.f32.mrf.mxu0
    %v482 = vadd.f32 %v148, %v481
    %v483 = vpop.f32.mrf.mxu0
    %484 = vdwg.mxu0
    %485 = vmatpush.bf16.msra.mxu0 %v385
    %486 = vmatpush.bf16.msra.mxu0 %v384
    %487 = vmatpush.bf16.msra.mxu0 %v383
    %488 = vmatpush.bf16.msra.mxu0 %v382
    %489 = vmatpush.bf16.msra.mxu0 %v381
    %490 = vmatpush.bf16.msra.mxu0 %v380
    %491 = vmatpush.bf16.msra.mxu0 %v379
    %492 = vmatpush.bf16.msra.mxu0 %v378
    %493 = vmatmul.bf16.gmra.mxu0 %v162
    %v494 = vpop.f32.mrf.mxu0
    %v495 = vadd.f32 %v482, %v494
    %v496 = vpop.f32.mrf.mxu0
    %497 = vdwg.mxu0
    %498 = vmatpush.bf16.msra.mxu0 %v393
    %499 = vmatpush.bf16.msra.mxu0 %v392
    %500 = vmatpush.bf16.msra.mxu0 %v391
    %501 = vmatpush.bf16.msra.mxu0 %v390
    %502 = vmatpush.bf16.msra.mxu0 %v389
    %503 = vmatpush.bf16.msra.mxu0 %v388
    %504 = vmatpush.bf16.msra.mxu0 %v387
    %505 = vmatpush.bf16.msra.mxu0 %v386
    %506 = vmatmul.bf16.gmra.mxu0 %v163
    %v507 = vpop.f32.mrf.mxu0
    %v508 = vadd.f32 %v495, %v507
    %v509 = vpop.f32.mrf.mxu0
    %510 = vdwg.mxu0
    %511 = vmatpush.bf16.msra.mxu0 %v401
    %512 = vmatpush.bf16.msra.mxu0 %v400
    %513 = vmatpush.bf16.msra.mxu0 %v399
    %514 = vmatpush.bf16.msra.mxu0 %v398
    %515 = vmatpush.bf16.msra.mxu0 %v397
    %516 = vmatpush.bf16.msra.mxu0 %v396
    %517 = vmatpush.bf16.msra.mxu0 %v395
    %518 = vmatpush.bf16.msra.mxu0 %v394
    %519 = vmatmul.bf16.gmra.mxu0 %v164
    %v520 = vpop.f32.mrf.mxu0
    %v521 = vadd.f32 %v508, %v520
    %v522 = vpop.f32.mrf.mxu0
    %523 = vdwg.mxu0
    %524 = vmatpush.bf16.msra.mxu0 %v409
    %525 = vmatpush.bf16.msra.mxu0 %v408
    %526 = vmatpush.bf16.msra.mxu0 %v407
    %527 = vmatpush.bf16.msra.mxu0 %v406
    %528 = vmatpush.bf16.msra.mxu0 %v405
    %529 = vmatpush.bf16.msra.mxu0 %v404
    %530 = vmatpush.bf16.msra.mxu0 %v403
    %531 = vmatpush.bf16.msra.mxu0 %v402
    %532 = vmatmul.bf16.gmra.mxu0 %v165
    %v533 = vpop.f32.mrf.mxu0
    %v534 = vadd.f32 %v521, %v533
    %v535 = vpop.f32.mrf.mxu0
    %536 = vdwg.mxu0
    %537 = vmatpush.bf16.msra.mxu0 %v417
    %538 = vmatpush.bf16.msra.mxu0 %v416
    %539 = vmatpush.bf16.msra.mxu0 %v415
    %540 = vmatpush.bf16.msra.mxu0 %v414
    %541 = vmatpush.bf16.msra.mxu0 %v413
    %542 = vmatpush.bf16.msra.mxu0 %v412
    %543 = vmatpush.bf16.msra.mxu0 %v411
    %544 = vmatpush.bf16.msra.mxu0 %v410
    %545 = vmatmul.bf16.gmra.mxu0 %v166
    %v546 = vpop.f32.mrf.mxu0
    %v547 = vadd.f32 %v534, %v546
    %v548 = vpop.f32.mrf.mxu0
    %549 = vdwg.mxu0
    %550 = vmatpush.bf16.msra.mxu0 0
    %551 = vmatpush.bf16.msra.mxu0 0
    %552 = vmatpush.bf16.msra.mxu0 0
    %553 = vmatpush.bf16.msra.mxu0 0
    %554 = vmatpush.bf16.msra.mxu0 0
    %555 = vmatpush.bf16.msra.mxu0 0
    %556 = vmatpush.bf16.msra.mxu0 0
    %557 = vmatpush.bf16.msra.mxu0 %v418
    %558 = vmatmul.bf16.gmra.mxu0 %v470
    %v559 = vpop.f32.mrf.mxu0
    %v560 = vadd.f32 %v547, %v559
    %v561 = vpop.f32.mrf.mxu0
    %562 = vdwg.mxu0
    %v563 = vmax.f32 %v560, 0.0
    %v564 = vpack.c.bf16 %v563, %v563
    %v565 = vld [vmem:[%s3] sm:$0xf]
    %v566 = vld [vmem:[%s3 + $0x4] sm:$0xf]
    %v567 = vld [vmem:[%s3 + $0x8] sm:$0xf]
    %v568 = vld [vmem:[%s3 + $0xc] sm:$0xf]
    %v569 = vld [vmem:[%s3 + $0x10] sm:$0xf]
    %v570 = vld [vmem:[%s3 + $0x14] sm:$0xf]
    %v571 = vld [vmem:[%s3 + $0x18] sm:$0xf]
    %v572 = vld [vmem:[%s3 + $0x1c] sm:$0xf]
    %v573 = vld [vmem:[%s3 + $0x20] sm:$0xf]
    %v574 = vld [vmem:[%s3 + $0x24] sm:$0xf]
    %v575 = vld [vmem:[%s3 + $0x28] sm:$0xf]
    %v576 = vld [vmem:[%s3 + $0x2c] sm:$0xf]
    %v577 = vld [vmem:[%s3 + $0x30] sm:$0xf]
    %v578 = vld [vmem:[%s3 + $0x34] sm:$0xf]
    %v579 = vld [vmem:[%s3 + $0x38] sm:$0xf]
    %v580 = vld [vmem:[%s3 + $0x3c] sm:$0xf]
    %v581 = vld [vmem:[%s4] sm:$0x1]
    %v583 = vperm.slane %v581, 0
    %v601 = vunpack.c.l.b16 %v565
    %v602 = vunpack.c.l.b16 %v566
    %v603 = vunpack.c.l.b16 %v567
    %v604 = vunpack.c.l.b16 %v568
    %v605 = vunpack.c.l.b16 %v569
    %v606 = vunpack.c.l.b16 %v570
    %v607 = vunpack.c.l.b16 %v571
    %v608 = vunpack.c.l.b16 %v572
    %v609 = vunpack.c.l.b16 %v573
    %v610 = vunpack.c.l.b16 %v574
    %v611 = vunpack.c.l.b16 %v575
    %v612 = vunpack.c.l.b16 %v576
    %v613 = vunpack.c.l.b16 %v577
    %v614 = vunpack.c.l.b16 %v578
    %v615 = vunpack.c.l.b16 %v579
    %v616 = vunpack.c.l.b16 %v580
    %v617 = vpack.c.b16 %v602, %v601
    %v618 = vpack.c.b16 %v604, %v603
    %v619 = vpack.c.b16 %v606, %v605
    %v620 = vpack.c.b16 %v608, %v607
    %v621 = vpack.c.b16 %v610, %v609
    %v622 = vpack.c.b16 %v612, %v611
    %v623 = vpack.c.b16 %v614, %v613
    %v624 = vpack.c.b16 %v616, %v615
    %633 = vmatpush.bf16.msra.mxu0 %v624
    %634 = vmatpush.bf16.msra.mxu0 %v623
    %635 = vmatpush.bf16.msra.mxu0 %v622
    %636 = vmatpush.bf16.msra.mxu0 %v621
    %637 = vmatpush.bf16.msra.mxu0 %v620
    %638 = vmatpush.bf16.msra.mxu0 %v619
    %639 = vmatpush.bf16.msra.mxu0 %v618
    %640 = vmatpush.bf16.msra.mxu0 %v617
    %641 = vmatmul.bf16.gmra.mxu0 %v564
    %v642 = vpop.f32.mrf.mxu0
    %v643 = vadd.f32 %v583, %v642
    %v644 = vpop.f32.mrf.mxu0
    %645 = vdwg.mxu0
    %v646 = vmax.f32 %v643, 0.0
    %v647 = vpack.c.bf16 %v646, %v646
    %v648 = vld [vmem:[%s5] sm:$0xf]
    %v649 = vld [vmem:[%s5 + $0x4] sm:$0xf]
    %v650 = vld [vmem:[%s5 + $0x8] sm:$0xf]
    %v651 = vld [vmem:[%s5 + $0xc] sm:$0xf]
    %v652 = vld [vmem:[%s5 + $0x10] sm:$0xf]
    %v653 = vld [vmem:[%s5 + $0x14] sm:$0xf]
    %v654 = vld [vmem:[%s5 + $0x18] sm:$0xf]
    %v655 = vld [vmem:[%s5 + $0x1c] sm:$0xf]
    %v656 = vld [vmem:[%s6] sm:$0x1]
    %v658 = vperm.slane %v656, 0
    %v668 = vunpack.c.l.b16 %v648
    %v669 = vunpack.c.l.b16 %v649
    %v670 = vunpack.c.l.b16 %v650
    %v671 = vunpack.c.l.b16 %v651
    %v672 = vunpack.c.l.b16 %v652
    %v673 = vunpack.c.l.b16 %v653
    %v674 = vunpack.c.l.b16 %v654
    %v675 = vunpack.c.l.b16 %v655
    %v676 = vpack.c.b16 %v669, %v668
    %v677 = vpack.c.b16 %v671, %v670
    %v678 = vpack.c.b16 %v673, %v672
    %v679 = vpack.c.b16 %v675, %v674
    %vm684 = vcmask 523264
    %v686 = vsel %vm684, %v647, 0
    %688 = vmatpush.bf16.msra.mxu0 0
    %689 = vmatpush.bf16.msra.mxu0 0
    %690 = vmatpush.bf16.msra.mxu0 0
    %691 = vmatpush.bf16.msra.mxu0 0
    %692 = vmatpush.bf16.msra.mxu0 %v679
    %693 = vmatpush.bf16.msra.mxu0 %v678
    %694 = vmatpush.bf16.msra.mxu0 %v677
    %695 = vmatpush.bf16.msra.mxu0 %v676
    %696 = vmatmul.bf16.gmra.mxu0 %v686
    %v697 = vpop.f32.mrf.mxu0
    %v698 = vadd.f32 %v658, %v697
    %v699 = vpop.f32.mrf.mxu0
    %700 = vdwg.mxu0
    %701 = vst [vmem:[#allocation5] sm:$0xff] %v698
    // Predicated region
    $region34: #{tpu_custom_call.1} parent=1 // pred_check
      _
    $region35: #{tpu_custom_call.1} parent=1 // pred_check_branch
      %703 = sbr.rel (0) target = $region37
    $region36: #{tpu_custom_call.1} parent=1 // pred_region
      %705 = vsyncadd [#allocation4], 0
      %s707 = sshll.u32 [#allocation5], 4
      %s708 = int_to_ptr.vmem [resolvable:$true] %s707
      %s709 = sshll.u32 %s7, 4
      %s710 = int_to_ptr.hbm [resolvable:$true] %s709
      %712 = dma.vmem_to_hbm [thread:$0]  %s708, 128, %s710, [#allocation4]
    $region37: #{tpu_custom_call.1} parent=1 // pred_fallthru
      _
    // Predicated region
    $region38: #{tpu_custom_call.1} parent=1 // pred_check
      _
    $region39: #{tpu_custom_call.1} parent=1 // pred_check_branch
      %714 = sbr.rel (0) target = $region41
    $region40: #{tpu_custom_call.1} parent=1 // pred_region
      %716 = dma.done [#allocation4], 128
    $region41: #{tpu_custom_call.1} parent=1 // pred_fallthru
      _
    %717 = vsyncpa [#allocation3], 1
    %718 = vsyncpa [#allocation4], 1

</llo_original>
